<compile_context>
chip_gen: v6e
topology: v6e:2x2x1
jax: 0.10.0
libtpu: 0.0.40
codegen_flags: <defaults>
</compile_context>

<pallas_src>
import functools

import jax
import jax.numpy as jnp
import numpy as np
from jax.experimental import pallas as pl
from jax.experimental.pallas import tpu as pltpu

# Conservative scoped-VMEM raise: above the 16/32 MiB defaults (v5e / v6e,v7x)
# but safely below v7x's 64 MiB physical VMEM.
_VMEM_LIMIT_BYTES = 48 * 1024 * 1024
# Tile-selection budget (double-buffered inputs/outputs + accumulator).
_VMEM_TILE_BUDGET = 40 * 1024 * 1024


def _round_up(x: int, m: int) -> int:
    return (x + m - 1) // m * m


def _select_tiles(n: int, in_f: int, out_f: int, itemsize: int, out_itemsize: int,
                  tm_hint: int = 512):
    """Pick (tm, tn, tk) so double-buffered tiles + f32 acc fit the VMEM budget."""
    # sublane granularity: 8 for 4-byte, 16 for 2-byte dtypes
    sub = 8 if itemsize >= 4 else 16
    tm = min(_round_up(tm_hint, sub), _round_up(n, sub))
    tn = min(_round_up(out_f, 128), 1024)          # lane-dense output tile
    tk = in_f if in_f <= 2048 else 512             # K-tile only for deep layers

    def vmem_bytes(tm_, tn_, tk_):
        x_b = 2 * tm_ * tk_ * itemsize             # double-buffered x tiles
        w_b = 2 * tk_ * tn_ * itemsize             # double-buffered weight tiles
        b_b = 2 * tn_ * 4                          # bias tiles (tiny)
        o_b = 2 * tm_ * tn_ * out_itemsize         # double-buffered output tiles
        acc = tm_ * tn_ * 4                        # f32 accumulator scratch
        return x_b + w_b + b_b + o_b + acc

    while tm > sub and vmem_bytes(tm, tn, tk) > _VMEM_TILE_BUDGET:
        tm = max(sub, tm // 2)
    while tn > 128 and vmem_bytes(tm, tn, tk) > _VMEM_TILE_BUDGET:
        tn = max(128, tn // 2)
    return tm, tn, tk


def _linear_block_kernel(x_ref, w_ref, b_ref, o_ref, acc_ref, *, is_last: bool):
    # x_ref: (tm, tk), w_ref: (tk, tn), b_ref: (1, tn), o_ref: (tm, tn)
    k = pl.program_id(2)

    @pl.when(k == 0)
    def _():
        acc_ref[...] = jnp.zeros_like(acc_ref)

    acc_ref[...] += jnp.dot(x_ref[...], w_ref[...],
                            preferred_element_type=jnp.float32)

    @pl.when(k == pl.num_programs(2) - 1)
    def _():
        out = acc_ref[...] + b_ref[...].astype(jnp.float32)  # broadcast over rows
        if not is_last:
            out = jnp.maximum(out, 0.0)
        o_ref[...] = out.astype(o_ref.dtype)


def prepare_linear_params(weight, bias, compute_dtype=None):
    """One-time parameter prep (hoisted out of the per-forward path).

    weight: [out_f, in_f] (PyTorch nn.Linear convention)  ->  w_t: [in_f, out_f]
    bias:   [out_f]                                        ->  b2d: [1, out_f]
    Optionally casts the weight to `compute_dtype` (e.g. bf16 for MXU peak).
    """
    w_t = jnp.asarray(weight).T
    if compute_dtype is not None:
        w_t = w_t.astype(compute_dtype)
    b2d = jnp.asarray(bias).reshape(1, -1)
    return w_t, b2d


def linear_block(x, w_t, b2d, *, is_last: bool = False, tm: int = 512,
                 compute_dtype=None, out_dtype=None):
    """Pallas equivalent of LinearBlock.forward: y = x @ W.T + b, optional ReLU.

    x:   [N, in_features]
    w_t: [in_features, out_features]   (pre-transposed via prepare_linear_params)
    b2d: [1, out_features]
    """
    N, in_f = x.shape
    in_f_w, out_f = w_t.shape
    assert in_f == in_f_w, "x / weight feature mismatch"
    assert b2d.shape == (1, out_f), "bias must be pre-reshaped to (1, out_f)"

    out_dtype = out_dtype if out_dtype is not None else x.dtype
    if compute_dtype is not None:
        x = x.astype(compute_dtype)
        w_t = w_t.astype(compute_dtype)

    itemsize = jnp.dtype(x.dtype).itemsize
    out_itemsize = jnp.dtype(out_dtype).itemsize
    tm_eff, tn, tk = _select_tiles(N, in_f, out_f, itemsize, out_itemsize,
                                   tm_hint=tm)

    # Pad to tile multiples (zero padding is exact for matmul + bias + ReLU).
    n_pad = _round_up(N, tm_eff)
    k_pad = _round_up(in_f, tk)
    f_pad = _round_up(out_f, tn)       # lane-dense (multiple of 128) output

    if (n_pad, k_pad) != (N, in_f):
        x = jnp.pad(x, ((0, n_pad - N), (0, k_pad - in_f)))
    if (k_pad, f_pad) != (in_f, out_f):
        w_t = jnp.pad(w_t, ((0, k_pad - in_f), (0, f_pad - out_f)))
    if f_pad != out_f:
        b2d = jnp.pad(b2d, ((0, 0), (0, f_pad - out_f)))

    grid = (n_pad // tm_eff, f_pad // tn, k_pad // tk)
    kernel = functools.partial(_linear_block_kernel, is_last=is_last)

    out = pl.pallas_call(
        kernel,
        out_shape=jax.ShapeDtypeStruct((n_pad, f_pad), out_dtype),
        grid_spec=pltpu.PrefetchScalarGridSpec(
            num_scalar_prefetch=0,
            grid=grid,
            in_specs=[
                pl.BlockSpec((tm_eff, tk), lambda i, j, k: (i, k)),
                pl.BlockSpec((tk, tn), lambda i, j, k: (k, j)),
                pl.BlockSpec((1, tn), lambda i, j, k: (0, j)),
            ],
            out_specs=pl.BlockSpec((tm_eff, tn), lambda i, j, k: (i, j)),
            scratch_shapes=[pltpu.VMEM((tm_eff, tn), jnp.float32)],
        ),
        compiler_params=pltpu.CompilerParams(
            dimension_semantics=("parallel", "parallel", "arbitrary"),
            vmem_limit_bytes=_VMEM_LIMIT_BYTES,
        ),
    )(x, w_t, b2d)

    if (n_pad, f_pad) != (N, out_f):
        out = out[:N, :out_f]
    return out


def init_linear_block_params(key, in_features, out_features,
                             weight_magnitude=1.0):
    """Deterministic init matching LinearBlock.init_weights.

    Weight ~ U(-sqrt(wm/(in+out)), +sqrt(wm/(in+out))), shape [out, in].
    Bias keeps PyTorch's default nn.Linear init: U(-1/sqrt(in), 1/sqrt(in)).
    """
    kw, kb = jax.random.split(key)
    bound_w = float(np.sqrt(weight_magnitude / (in_features + out_features)))
    weight = jax.random.uniform(
        kw, (out_features, in_features), jnp.float32,
        minval=-bound_w, maxval=bound_w)
    bound_b = float(1.0 / np.sqrt(in_features))
    bias = jax.random.uniform(
        kb, (out_features,), jnp.float32, minval=-bound_b, maxval=bound_b)
    return weight, bias


if __name__ == "__main__":
    key = jax.random.PRNGKey(0)
    k_x, k_p = jax.random.split(key)

    N, in_features, out_features = 256, 32, 64
    x = jax.random.normal(k_x, (N, in_features), jnp.float32)
    weight, bias = init_linear_block_params(
        k_p, in_features, out_features, weight_magnitude=1.0)

    # One-time parameter prep: transpose hoisted out of the forward path.
    w_t, b2d = prepare_linear_params(weight, bias)

    # Hidden block (Linear + ReLU) and last block (Linear only), f32 path.
    y = jax.block_until_ready(linear_block(x, w_t, b2d, is_last=False))
    y_last = jax.block_until_ready(linear_block(x, w_t, b2d, is_last=True))

    ref = np.asarray(x) @ np.asarray(weight).T + np.asarray(bias)
    np.testing.assert_allclose(np.asarray(y_last), ref, rtol=1e-5, atol=1e-5)
    np.testing.assert_allclose(np.asarray(y), np.maximum(ref, 0.0),
                               rtol=1e-5, atol=1e-5)

    # bf16-fed MXU path (halves HBM traffic, f32 accumulation); looser tolerance.
    w_t_bf, b2d_bf = prepare_linear_params(weight, bias,
                                           compute_dtype=jnp.bfloat16)
    y_bf = jax.block_until_ready(
        linear_block(x, w_t_bf, b2d_bf, is_last=True,
                     compute_dtype=jnp.bfloat16))
    np.testing.assert_allclose(np.asarray(y_bf), ref, rtol=2e-2, atol=2e-2)

    print("KERNEL_OK")
</pallas_src>

<mosaic_0001>
module attributes {stable_mosaic.version = 11 : i64} {
  func.func @_linear_block_kernel(%arg0: i32, %arg1: i32, %arg2: i32, %arg3: memref<256x32xf32, #tpu.memory_space<vmem>>, %arg4: memref<32x128xf32, #tpu.memory_space<vmem>>, %arg5: memref<1x128xf32, #tpu.memory_space<vmem>>, %arg6: memref<256x128xf32, #tpu.memory_space<vmem>>, %arg7: memref<256x128xf32, #tpu.memory_space<vmem>>) attributes {dimension_semantics = [#tpu.dimension_semantics<parallel>, #tpu.dimension_semantics<parallel>, #tpu.dimension_semantics<arbitrary>], iteration_bounds = array<i64: 1, 1, 1>, scalar_prefetch = 0 : i64, scratch_operands = 1 : i64, tpu.core_type = #tpu.core_type<tc>, window_params = [{transform_indices = @transform_0, window_bounds = array<i64: 256, 32>}, {transform_indices = @transform_1, window_bounds = array<i64: 32, 128>}, {transform_indices = @transform_2, window_bounds = array<i64: 1, 128>}, {transform_indices = @transform_3, window_bounds = array<i64: 256, 128>}]} {
    %c0_i32 = arith.constant 0 : i32
    %0 = arith.cmpi eq, %arg2, %c0_i32 : i32
    %1 = arith.extui %0 : i1 to i32
    %c0_i32_0 = arith.constant 0 : i32
    %2 = arith.cmpi ne, %1, %c0_i32_0 : i32
    scf.if %2 {
      %cst_10 = arith.constant 0.000000e+00 : f32
      %12 = vector.broadcast %cst_10 : f32 to vector<256x128xf32>
      %c0_11 = arith.constant 0 : index
      %c0_12 = arith.constant 0 : index
      %13 = vector.load %arg7[%c0_11, %c0_12] : memref<256x128xf32, #tpu.memory_space<vmem>>, vector<256x128xf32>
      tpu.vector_store %arg7[%c0_11, %c0_12], %12 {strides = array<i32>} : memref<256x128xf32, #tpu.memory_space<vmem>>, vector<256x128xf32>,
    } else {
    }
    %c0 = arith.constant 0 : index
    %c0_1 = arith.constant 0 : index
    %3 = vector.load %arg7[%c0, %c0_1] : memref<256x128xf32, #tpu.memory_space<vmem>>, vector<256x128xf32>
    %c0_2 = arith.constant 0 : index
    %c0_3 = arith.constant 0 : index
    %4 = vector.load %arg3[%c0_2, %c0_3] : memref<256x32xf32, #tpu.memory_space<vmem>>, vector<256x32xf32>
    %c0_4 = arith.constant 0 : index
    %c0_5 = arith.constant 0 : index
    %5 = vector.load %arg4[%c0_4, %c0_5] : memref<32x128xf32, #tpu.memory_space<vmem>>, vector<32x128xf32>
    %cst = arith.constant dense<0.000000e+00> : vector<256x128xf32>
    %6 = tpu.matmul %4, %5, %cst {dimension_numbers = #tpu.dot_dimension_numbers<[1], [0], [0], [1], [0, 0, 1, 1], [], []>} : vector<256x32xf32>, vector<32x128xf32>, vector<256x128xf32> -> vector<256x128xf32>
    %7 = arith.addf %3, %6 : vector<256x128xf32>
    %c0_6 = arith.constant 0 : index
    %c0_7 = arith.constant 0 : index
    %8 = vector.load %arg7[%c0_6, %c0_7] : memref<256x128xf32, #tpu.memory_space<vmem>>, vector<256x128xf32>
    tpu.vector_store %arg7[%c0_6, %c0_7], %7 {strides = array<i32>} : memref<256x128xf32, #tpu.memory_space<vmem>>, vector<256x128xf32>,
    %c0_i32_8 = arith.constant 0 : i32
    %9 = arith.cmpi eq, %arg2, %c0_i32_8 : i32
    %10 = arith.extui %9 : i1 to i32
    %c0_i32_9 = arith.constant 0 : i32
    %11 = arith.cmpi ne, %10, %c0_i32_9 : i32
    scf.if %11 {
      %c0_10 = arith.constant 0 : index
      %c0_11 = arith.constant 0 : index
      %12 = vector.load %arg7[%c0_10, %c0_11] : memref<256x128xf32, #tpu.memory_space<vmem>>, vector<256x128xf32>
      %c0_12 = arith.constant 0 : index
      %c0_13 = arith.constant 0 : index
      %13 = vector.load %arg5[%c0_12, %c0_13] : memref<1x128xf32, #tpu.memory_space<vmem>>, vector<1x128xf32>
      %14 = vector.broadcast %13 : vector<1x128xf32> to vector<256x128xf32>
      %15 = arith.addf %12, %14 : vector<256x128xf32>
      %cst_14 = arith.constant 0.000000e+00 : f32
      %16 = vector.broadcast %cst_14 : f32 to vector<256x128xf32>
      %17 = arith.maximumf %15, %16 : vector<256x128xf32>
      %c0_15 = arith.constant 0 : index
      %c0_16 = arith.constant 0 : index
      %18 = vector.load %arg6[%c0_15, %c0_16] : memref<256x128xf32, #tpu.memory_space<vmem>>, vector<256x128xf32>
      tpu.vector_store %arg6[%c0_15, %c0_16], %17 {strides = array<i32>} : memref<256x128xf32, #tpu.memory_space<vmem>>, vector<256x128xf32>,
    } else {
    }
    return
  }
  func.func @transform_0(%arg0: i32, %arg1: i32, %arg2: i32) -> (i32, i32) {
    %c0_i32 = arith.constant 0 : i32
    return %arg0, %arg2 : i32, i32
  }
  func.func @transform_1(%arg0: i32, %arg1: i32, %arg2: i32) -> (i32, i32) {
    %c0_i32 = arith.constant 0 : i32
    return %arg2, %arg1 : i32, i32
  }
  func.func @transform_2(%arg0: i32, %arg1: i32, %arg2: i32) -> (i32, i32) {
    %c0_i32 = arith.constant 0 : i32
    %c0_i32_0 = arith.constant 0 : i32
    return %c0_i32, %arg1 : i32, i32
  }
  func.func @transform_3(%arg0: i32, %arg1: i32, %arg2: i32) -> (i32, i32) {
    %c0_i32 = arith.constant 0 : i32
    return %arg0, %arg1 : i32, i32
  }
}

</mosaic_0001>

<llo_original>
// kernel: tpu_custom_call.1
$region0: #{tpu_custom_call.1}
  #allocation0 [shape = 'u32[]', space=smem, size = 0x4, offset = 0x4, fixed_abs, tag = 'smem constant byte address 0x4 - core index']
  #allocation1 [shape = 'u32[144,128]{1,0:T(1,128)}', space=vmem, size = 0x12000, scoped, tag = 'internal scratch']
  #allocation2 [shape = 'f32[256,128]{1,0:T(8,128)}', space=vmem, size = 0x20000, scoped, tag = 'scratch operand']
  %s0 = inlined_call_operand.vmem [shape: f32[256,32], index: 0, kind: input, shape index: {}]
  %s1 = inlined_call_operand.vmem [shape: f32[32,128], index: 1, kind: input, shape index: {}]
  %s2 = inlined_call_operand.vmem [shape: f32[1,128], index: 2, kind: input, shape index: {}]
  %s3 = inlined_call_operand.hbm [shape: f32[256,128], index: 3, kind: output, shape index: {}]
  %s4 = sld [smem:[#allocation0]]
  $region30: #{tpu_custom_call.1} parent=0
    _
  %s6 = ssub.s32 1, %s4
  %s7 = scalar_select 0, %s6, %s4
  $region1: #{tpu_custom_call.1} parent=0
    #allocation3 [shape = 'u8[131072]{0}', space=vmem, size = 0x20000, scoped, tag = 'output window, operand 0, single buffered']
    #allocation4 [shape = 's32[1]{0}', space=sflag, size = 0x4, scoped, tag = 'scoped memory for tpu_custom_call.1']
    %8 = vsyncpa [#allocation4], 0
    // Predicated region
    $region2: #{tpu_custom_call.1} parent=1 // pred_check
      _
    $region3: #{tpu_custom_call.1} parent=1 // pred_check_branch
      %10 = sbr.rel (0) target = $region5
    $region4: #{tpu_custom_call.1} parent=1 // pred_region
      _
    $region5: #{tpu_custom_call.1} parent=1 // pred_fallthru
      _
    // Predicated region
    $region6: #{tpu_custom_call.1} parent=1 // pred_check
      _
    $region7: #{tpu_custom_call.1} parent=1 // pred_check_branch
      %12 = sbr.rel (0) target = $region9
    $region8: #{tpu_custom_call.1} parent=1 // pred_region
      _
    $region9: #{tpu_custom_call.1} parent=1 // pred_fallthru
      _
    // Predicated region
    $region10: #{tpu_custom_call.1} parent=1 // pred_check
      _
    $region11: #{tpu_custom_call.1} parent=1 // pred_check_branch
      %14 = sbr.rel (0) target = $region13
    $region12: #{tpu_custom_call.1} parent=1 // pred_region
      _
    $region13: #{tpu_custom_call.1} parent=1 // pred_fallthru
      _
    %p15 = scmp.eq.s32.totalorder 0, 0
    // Predicated region
    $region14: #{tpu_custom_call.1} parent=1 // pred_check
      %p16 = pneg %p15
    $region15: #{tpu_custom_call.1} parent=1 // pred_check_branch
      %18 = sbr.rel (%p16) target = $region17
    $region16: #{tpu_custom_call.1} parent=1 // pred_region
      %19 = vst [vmem:[#allocation2] sm:$0xff] 0.0
      %20 = vst [vmem:[#allocation2 + $0x8] sm:$0xff] 0.0
      %21 = vst [vmem:[#allocation2 + $0x10] sm:$0xff] 0.0
      %22 = vst [vmem:[#allocation2 + $0x18] sm:$0xff] 0.0
      %23 = vst [vmem:[#allocation2 + $0x20] sm:$0xff] 0.0
      %24 = vst [vmem:[#allocation2 + $0x28] sm:$0xff] 0.0
      %25 = vst [vmem:[#allocation2 + $0x30] sm:$0xff] 0.0
      %26 = vst [vmem:[#allocation2 + $0x38] sm:$0xff] 0.0
      %27 = vst [vmem:[#allocation2 + $0x40] sm:$0xff] 0.0
      %28 = vst [vmem:[#allocation2 + $0x48] sm:$0xff] 0.0
      %29 = vst [vmem:[#allocation2 + $0x50] sm:$0xff] 0.0
      %30 = vst [vmem:[#allocation2 + $0x58] sm:$0xff] 0.0
      %31 = vst [vmem:[#allocation2 + $0x60] sm:$0xff] 0.0
      %32 = vst [vmem:[#allocation2 + $0x68] sm:$0xff] 0.0
      %33 = vst [vmem:[#allocation2 + $0x70] sm:$0xff] 0.0
      %34 = vst [vmem:[#allocation2 + $0x78] sm:$0xff] 0.0
      %35 = vst [vmem:[#allocation2 + $0x80] sm:$0xff] 0.0
      %36 = vst [vmem:[#allocation2 + $0x88] sm:$0xff] 0.0
      %37 = vst [vmem:[#allocation2 + $0x90] sm:$0xff] 0.0
      %38 = vst [vmem:[#allocation2 + $0x98] sm:$0xff] 0.0
      %39 = vst [vmem:[#allocation2 + $0xa0] sm:$0xff] 0.0
      %40 = vst [vmem:[#allocation2 + $0xa8] sm:$0xff] 0.0
      %41 = vst [vmem:[#allocation2 + $0xb0] sm:$0xff] 0.0
      %42 = vst [vmem:[#allocation2 + $0xb8] sm:$0xff] 0.0
      %43 = vst [vmem:[#allocation2 + $0xc0] sm:$0xff] 0.0
      %44 = vst [vmem:[#allocation2 + $0xc8] sm:$0xff] 0.0
      %45 = vst [vmem:[#allocation2 + $0xd0] sm:$0xff] 0.0
      %46 = vst [vmem:[#allocation2 + $0xd8] sm:$0xff] 0.0
      %47 = vst [vmem:[#allocation2 + $0xe0] sm:$0xff] 0.0
      %48 = vst [vmem:[#allocation2 + $0xe8] sm:$0xff] 0.0
      %49 = vst [vmem:[#allocation2 + $0xf0] sm:$0xff] 0.0
      %50 = vst [vmem:[#allocation2 + $0xf8] sm:$0xff] 0.0
    $region17: #{tpu_custom_call.1} parent=1 // pred_fallthru
      _
    %v51 = vld [vmem:[#allocation2] sm:$0xff]
    %v52 = vld [vmem:[#allocation2 + $0x8] sm:$0xff]
    %v53 = vld [vmem:[#allocation2 + $0x10] sm:$0xff]
    %v54 = vld [vmem:[#allocation2 + $0x18] sm:$0xff]
    %v55 = vld [vmem:[#allocation2 + $0x20] sm:$0xff]
    %v56 = vld [vmem:[#allocation2 + $0x28] sm:$0xff]
    %v57 = vld [vmem:[#allocation2 + $0x30] sm:$0xff]
    %v58 = vld [vmem:[#allocation2 + $0x38] sm:$0xff]
    %v59 = vld [vmem:[#allocation2 + $0x40] sm:$0xff]
    %v60 = vld [vmem:[#allocation2 + $0x48] sm:$0xff]
    %v61 = vld [vmem:[#allocation2 + $0x50] sm:$0xff]
    %v62 = vld [vmem:[#allocation2 + $0x58] sm:$0xff]
    %v63 = vld [vmem:[#allocation2 + $0x60] sm:$0xff]
    %v64 = vld [vmem:[#allocation2 + $0x68] sm:$0xff]
    %v65 = vld [vmem:[#allocation2 + $0x70] sm:$0xff]
    %v66 = vld [vmem:[#allocation2 + $0x78] sm:$0xff]
    %v67 = vld [vmem:[#allocation2 + $0x80] sm:$0xff]
    %v68 = vld [vmem:[#allocation2 + $0x88] sm:$0xff]
    %v69 = vld [vmem:[#allocation2 + $0x90] sm:$0xff]
    %v70 = vld [vmem:[#allocation2 + $0x98] sm:$0xff]
    %v71 = vld [vmem:[#allocation2 + $0xa0] sm:$0xff]
    %v72 = vld [vmem:[#allocation2 + $0xa8] sm:$0xff]
    %v73 = vld [vmem:[#allocation2 + $0xb0] sm:$0xff]
    %v74 = vld [vmem:[#allocation2 + $0xb8] sm:$0xff]
    %v75 = vld [vmem:[#allocation2 + $0xc0] sm:$0xff]
    %v76 = vld [vmem:[#allocation2 + $0xc8] sm:$0xff]
    %v77 = vld [vmem:[#allocation2 + $0xd0] sm:$0xff]
    %v78 = vld [vmem:[#allocation2 + $0xd8] sm:$0xff]
    %v79 = vld [vmem:[#allocation2 + $0xe0] sm:$0xff]
    %v80 = vld [vmem:[#allocation2 + $0xe8] sm:$0xff]
    %v81 = vld [vmem:[#allocation2 + $0xf0] sm:$0xff]
    %v82 = vld [vmem:[#allocation2 + $0xf8] sm:$0xff]
    %v83 = vld [vmem:[%s0] sm:$0xff]
    %v84 = vld [vmem:[%s0 + $0x8] sm:$0xff]
    %v85 = vld [vmem:[%s0 + $0x10] sm:$0xff]
    %v86 = vld [vmem:[%s0 + $0x18] sm:$0xff]
    %v87 = vld [vmem:[%s0 + $0x20] sm:$0xff]
    %v88 = vld [vmem:[%s0 + $0x28] sm:$0xff]
    %v89 = vld [vmem:[%s0 + $0x30] sm:$0xff]
    %v90 = vld [vmem:[%s0 + $0x38] sm:$0xff]
    %v91 = vld [vmem:[%s0 + $0x40] sm:$0xff]
    %v92 = vld [vmem:[%s0 + $0x48] sm:$0xff]
    %v93 = vld [vmem:[%s0 + $0x50] sm:$0xff]
    %v94 = vld [vmem:[%s0 + $0x58] sm:$0xff]
    %v95 = vld [vmem:[%s0 + $0x60] sm:$0xff]
    %v96 = vld [vmem:[%s0 + $0x68] sm:$0xff]
    %v97 = vld [vmem:[%s0 + $0x70] sm:$0xff]
    %v98 = vld [vmem:[%s0 + $0x78] sm:$0xff]
    %v99 = vld [vmem:[%s0 + $0x80] sm:$0xff]
    %v100 = vld [vmem:[%s0 + $0x88] sm:$0xff]
    %v101 = vld [vmem:[%s0 + $0x90] sm:$0xff]
    %v102 = vld [vmem:[%s0 + $0x98] sm:$0xff]
    %v103 = vld [vmem:[%s0 + $0xa0] sm:$0xff]
    %v104 = vld [vmem:[%s0 + $0xa8] sm:$0xff]
    %v105 = vld [vmem:[%s0 + $0xb0] sm:$0xff]
    %v106 = vld [vmem:[%s0 + $0xb8] sm:$0xff]
    %v107 = vld [vmem:[%s0 + $0xc0] sm:$0xff]
    %v108 = vld [vmem:[%s0 + $0xc8] sm:$0xff]
    %v109 = vld [vmem:[%s0 + $0xd0] sm:$0xff]
    %v110 = vld [vmem:[%s0 + $0xd8] sm:$0xff]
    %v111 = vld [vmem:[%s0 + $0xe0] sm:$0xff]
    %v112 = vld [vmem:[%s0 + $0xe8] sm:$0xff]
    %v113 = vld [vmem:[%s0 + $0xf0] sm:$0xff]
    %v114 = vld [vmem:[%s0 + $0xf8] sm:$0xff]
    %v115 = vld [vmem:[%s1] sm:$0xff]
    %v116 = vld [vmem:[%s1 + $0x8] sm:$0xff]
    %v117 = vld [vmem:[%s1 + $0x10] sm:$0xff]
    %v118 = vld [vmem:[%s1 + $0x18] sm:$0xff]
    %vm119 = vcmask 261120
    %v121 = vsel %vm119, %v83, 0
    %v124 = vsel %vm119, %v84, 0
    %v127 = vsel %vm119, %v85, 0
    %v130 = vsel %vm119, %v86, 0
    %v133 = vsel %vm119, %v87, 0
    %v136 = vsel %vm119, %v88, 0
    %v139 = vsel %vm119, %v89, 0
    %v142 = vsel %vm119, %v90, 0
    %v145 = vsel %vm119, %v91, 0
    %v148 = vsel %vm119, %v92, 0
    %v151 = vsel %vm119, %v93, 0
    %v154 = vsel %vm119, %v94, 0
    %v157 = vsel %vm119, %v95, 0
    %v160 = vsel %vm119, %v96, 0
    %v163 = vsel %vm119, %v97, 0
    %v166 = vsel %vm119, %v98, 0
    %v169 = vsel %vm119, %v99, 0
    %v172 = vsel %vm119, %v100, 0
    %v175 = vsel %vm119, %v101, 0
    %v178 = vsel %vm119, %v102, 0
    %v181 = vsel %vm119, %v103, 0
    %v184 = vsel %vm119, %v104, 0
    %v187 = vsel %vm119, %v105, 0
    %v190 = vsel %vm119, %v106, 0
    %v193 = vsel %vm119, %v107, 0
    %v196 = vsel %vm119, %v108, 0
    %v199 = vsel %vm119, %v109, 0
    %v202 = vsel %vm119, %v110, 0
    %v205 = vsel %vm119, %v111, 0
    %v208 = vsel %vm119, %v112, 0
    %v211 = vsel %vm119, %v113, 0
    %v214 = vsel %vm119, %v114, 0
    %216 = vmatprep.subr.mxu0 0.0
    %217 = vmatpush1.msra.mxu0 0.0
    %218 = vmatprep.subr.mxu0 0.0
    %219 = vmatpush1.msra.mxu0 0.0
    %220 = vmatprep.subr.mxu0 0.0
    %221 = vmatpush1.msra.mxu0 0.0
    %222 = vmatprep.subr.mxu0 0.0
    %223 = vmatpush1.msra.mxu0 0.0
    %224 = vmatprep.subr.mxu0 0.0
    %225 = vmatpush1.msra.mxu0 0.0
    %226 = vmatprep.subr.mxu0 0.0
    %227 = vmatpush1.msra.mxu0 0.0
    %228 = vmatprep.subr.mxu0 0.0
    %229 = vmatpush1.msra.mxu0 0.0
    %230 = vmatprep.subr.mxu0 0.0
    %231 = vmatpush1.msra.mxu0 0.0
    %232 = vmatprep.subr.mxu0 0.0
    %233 = vmatpush1.msra.mxu0 0.0
    %234 = vmatprep.subr.mxu0 0.0
    %235 = vmatpush1.msra.mxu0 0.0
    %236 = vmatprep.subr.mxu0 0.0
    %237 = vmatpush1.msra.mxu0 0.0
    %238 = vmatprep.subr.mxu0 0.0
    %239 = vmatpush1.msra.mxu0 0.0
    %240 = vmatprep.subr.mxu0 0.0
    %241 = vmatpush1.msra.mxu0 %v118
    %242 = vmatprep.subr.mxu0 0.0
    %243 = vmatpush1.msra.mxu0 %v117
    %244 = vmatprep.subr.mxu0 0.0
    %245 = vmatpush1.msra.mxu0 %v116
    %246 = vmatprep.subr.mxu0 0.0
    %247 = vmatpush1.msra.mxu0 %v115
    %248 = vmatprep.subr.mxu0 0.0
    %249 = vmatpush2.msra.mxu0 0.0
    %250 = vmatprep.subr.mxu0 0.0
    %251 = vmatpush2.msra.mxu0 0.0
    %252 = vmatprep.subr.mxu0 0.0
    %253 = vmatpush2.msra.mxu0 0.0
    %254 = vmatprep.subr.mxu0 0.0
    %255 = vmatpush2.msra.mxu0 0.0
    %256 = vmatprep.subr.mxu0 0.0
    %257 = vmatpush2.msra.mxu0 0.0
    %258 = vmatprep.subr.mxu0 0.0
    %259 = vmatpush2.msra.mxu0 0.0
    %260 = vmatprep.subr.mxu0 0.0
    %261 = vmatpush2.msra.mxu0 0.0
    %262 = vmatprep.subr.mxu0 0.0
    %263 = vmatpush2.msra.mxu0 0.0
    %264 = vmatprep.subr.mxu0 0.0
    %265 = vmatpush2.msra.mxu0 0.0
    %266 = vmatprep.subr.mxu0 0.0
    %267 = vmatpush2.msra.mxu0 0.0
    %268 = vmatprep.subr.mxu0 0.0
    %269 = vmatpush2.msra.mxu0 0.0
    %270 = vmatprep.subr.mxu0 0.0
    %271 = vmatpush2.msra.mxu0 0.0
    %272 = vmatprep.subr.mxu0 0.0
    %273 = vmatpush2.msra.mxu0 0.0
    %274 = vmatprep.subr.mxu0 0.0
    %275 = vmatpush2.msra.mxu0 0.0
    %276 = vmatprep.subr.mxu0 0.0
    %277 = vmatpush2.msra.mxu0 0.0
    %278 = vmatprep.subr.mxu0 0.0
    %279 = vmatpush2.msra.mxu0 0.0
    %280 = vmatprep.mubr.f32.mxu0 0.0
    %281 = vmatmul.mubr.f32.gmra.mxu0 %v121
    %v282 = vpop.f32.mrf.mxu0
    %v283 = vadd.f32 0.0, %v282
    %v284 = vpop.f32.mrf.mxu0
    %285 = vmatprep.mubr.f32.mxu0 0.0
    %286 = vmatmul.mubr.f32.gmra.mxu0 %v124
    %v287 = vpop.f32.mrf.mxu0
    %v288 = vadd.f32 0.0, %v287
    %v289 = vpop.f32.mrf.mxu0
    %290 = vmatprep.mubr.f32.mxu0 0.0
    %291 = vmatmul.mubr.f32.gmra.mxu0 %v127
    %v292 = vpop.f32.mrf.mxu0
    %v293 = vadd.f32 0.0, %v292
    %v294 = vpop.f32.mrf.mxu0
    %295 = vmatprep.mubr.f32.mxu0 0.0
    %296 = vmatmul.mubr.f32.gmra.mxu0 %v130
    %v297 = vpop.f32.mrf.mxu0
    %v298 = vadd.f32 0.0, %v297
    %v299 = vpop.f32.mrf.mxu0
    %300 = vmatprep.mubr.f32.mxu0 0.0
    %301 = vmatmul.mubr.f32.gmra.mxu0 %v133
    %v302 = vpop.f32.mrf.mxu0
    %v303 = vadd.f32 0.0, %v302
    %v304 = vpop.f32.mrf.mxu0
    %305 = vmatprep.mubr.f32.mxu0 0.0
    %306 = vmatmul.mubr.f32.gmra.mxu0 %v136
    %v307 = vpop.f32.mrf.mxu0
    %v308 = vadd.f32 0.0, %v307
    %v309 = vpop.f32.mrf.mxu0
    %310 = vmatprep.mubr.f32.mxu0 0.0
    %311 = vmatmul.mubr.f32.gmra.mxu0 %v139
    %v312 = vpop.f32.mrf.mxu0
    %v313 = vadd.f32 0.0, %v312
    %v314 = vpop.f32.mrf.mxu0
    %315 = vmatprep.mubr.f32.mxu0 0.0
    %316 = vmatmul.mubr.f32.gmra.mxu0 %v142
    %v317 = vpop.f32.mrf.mxu0
    %v318 = vadd.f32 0.0, %v317
    %v319 = vpop.f32.mrf.mxu0
    %320 = vmatprep.mubr.f32.mxu0 0.0
    %321 = vmatmul.mubr.f32.gmra.mxu0 %v145
    %v322 = vpop.f32.mrf.mxu0
    %v323 = vadd.f32 0.0, %v322
    %v324 = vpop.f32.mrf.mxu0
    %325 = vmatprep.mubr.f32.mxu0 0.0
    %326 = vmatmul.mubr.f32.gmra.mxu0 %v148
    %v327 = vpop.f32.mrf.mxu0
    %v328 = vadd.f32 0.0, %v327
    %v329 = vpop.f32.mrf.mxu0
    %330 = vmatprep.mubr.f32.mxu0 0.0
    %331 = vmatmul.mubr.f32.gmra.mxu0 %v151
    %v332 = vpop.f32.mrf.mxu0
    %v333 = vadd.f32 0.0, %v332
    %v334 = vpop.f32.mrf.mxu0
    %335 = vmatprep.mubr.f32.mxu0 0.0
    %336 = vmatmul.mubr.f32.gmra.mxu0 %v154
    %v337 = vpop.f32.mrf.mxu0
    %v338 = vadd.f32 0.0, %v337
    %v339 = vpop.f32.mrf.mxu0
    %340 = vmatprep.mubr.f32.mxu0 0.0
    %341 = vmatmul.mubr.f32.gmra.mxu0 %v157
    %v342 = vpop.f32.mrf.mxu0
    %v343 = vadd.f32 0.0, %v342
    %v344 = vpop.f32.mrf.mxu0
    %345 = vmatprep.mubr.f32.mxu0 0.0
    %346 = vmatmul.mubr.f32.gmra.mxu0 %v160
    %v347 = vpop.f32.mrf.mxu0
    %v348 = vadd.f32 0.0, %v347
    %v349 = vpop.f32.mrf.mxu0
    %350 = vmatprep.mubr.f32.mxu0 0.0
    %351 = vmatmul.mubr.f32.gmra.mxu0 %v163
    %v352 = vpop.f32.mrf.mxu0
    %v353 = vadd.f32 0.0, %v352
    %v354 = vpop.f32.mrf.mxu0
    %355 = vmatprep.mubr.f32.mxu0 0.0
    %356 = vmatmul.mubr.f32.gmra.mxu0 %v166
    %v357 = vpop.f32.mrf.mxu0
    %v358 = vadd.f32 0.0, %v357
    %v359 = vpop.f32.mrf.mxu0
    %360 = vmatprep.mubr.f32.mxu0 0.0
    %361 = vmatmul.mubr.f32.gmra.mxu0 %v169
    %v362 = vpop.f32.mrf.mxu0
    %v363 = vadd.f32 0.0, %v362
    %v364 = vpop.f32.mrf.mxu0
    %365 = vmatprep.mubr.f32.mxu0 0.0
    %366 = vmatmul.mubr.f32.gmra.mxu0 %v172
    %v367 = vpop.f32.mrf.mxu0
    %v368 = vadd.f32 0.0, %v367
    %v369 = vpop.f32.mrf.mxu0
    %370 = vmatprep.mubr.f32.mxu0 0.0
    %371 = vmatmul.mubr.f32.gmra.mxu0 %v175
    %v372 = vpop.f32.mrf.mxu0
    %v373 = vadd.f32 0.0, %v372
    %v374 = vpop.f32.mrf.mxu0
    %375 = vmatprep.mubr.f32.mxu0 0.0
    %376 = vmatmul.mubr.f32.gmra.mxu0 %v178
    %v377 = vpop.f32.mrf.mxu0
    %v378 = vadd.f32 0.0, %v377
    %v379 = vpop.f32.mrf.mxu0
    %380 = vmatprep.mubr.f32.mxu0 0.0
    %381 = vmatmul.mubr.f32.gmra.mxu0 %v181
    %v382 = vpop.f32.mrf.mxu0
    %v383 = vadd.f32 0.0, %v382
    %v384 = vpop.f32.mrf.mxu0
    %385 = vmatprep.mubr.f32.mxu0 0.0
    %386 = vmatmul.mubr.f32.gmra.mxu0 %v184
    %v387 = vpop.f32.mrf.mxu0
    %v388 = vadd.f32 0.0, %v387
    %v389 = vpop.f32.mrf.mxu0
    %390 = vmatprep.mubr.f32.mxu0 0.0
    %391 = vmatmul.mubr.f32.gmra.mxu0 %v187
    %v392 = vpop.f32.mrf.mxu0
    %v393 = vadd.f32 0.0, %v392
    %v394 = vpop.f32.mrf.mxu0
    %395 = vmatprep.mubr.f32.mxu0 0.0
    %396 = vmatmul.mubr.f32.gmra.mxu0 %v190
    %v397 = vpop.f32.mrf.mxu0
    %v398 = vadd.f32 0.0, %v397
    %v399 = vpop.f32.mrf.mxu0
    %400 = vmatprep.mubr.f32.mxu0 0.0
    %401 = vmatmul.mubr.f32.gmra.mxu0 %v193
    %v402 = vpop.f32.mrf.mxu0
    %v403 = vadd.f32 0.0, %v402
    %v404 = vpop.f32.mrf.mxu0
    %405 = vmatprep.mubr.f32.mxu0 0.0
    %406 = vmatmul.mubr.f32.gmra.mxu0 %v196
    %v407 = vpop.f32.mrf.mxu0
    %v408 = vadd.f32 0.0, %v407
    %v409 = vpop.f32.mrf.mxu0
    %410 = vmatprep.mubr.f32.mxu0 0.0
    %411 = vmatmul.mubr.f32.gmra.mxu0 %v199
    %v412 = vpop.f32.mrf.mxu0
    %v413 = vadd.f32 0.0, %v412
    %v414 = vpop.f32.mrf.mxu0
    %415 = vmatprep.mubr.f32.mxu0 0.0
    %416 = vmatmul.mubr.f32.gmra.mxu0 %v202
    %v417 = vpop.f32.mrf.mxu0
    %v418 = vadd.f32 0.0, %v417
    %v419 = vpop.f32.mrf.mxu0
    %420 = vmatprep.mubr.f32.mxu0 0.0
    %421 = vmatmul.mubr.f32.gmra.mxu0 %v205
    %v422 = vpop.f32.mrf.mxu0
    %v423 = vadd.f32 0.0, %v422
    %v424 = vpop.f32.mrf.mxu0
    %425 = vmatprep.mubr.f32.mxu0 0.0
    %426 = vmatmul.mubr.f32.gmra.mxu0 %v208
    %v427 = vpop.f32.mrf.mxu0
    %v428 = vadd.f32 0.0, %v427
    %v429 = vpop.f32.mrf.mxu0
    %430 = vmatprep.mubr.f32.mxu0 0.0
    %431 = vmatmul.mubr.f32.gmra.mxu0 %v211
    %v432 = vpop.f32.mrf.mxu0
    %v433 = vadd.f32 0.0, %v432
    %v434 = vpop.f32.mrf.mxu0
    %435 = vmatprep.mubr.f32.mxu0 0.0
    %436 = vmatmul.mubr.f32.gmra.mxu0 %v214
    %v437 = vpop.f32.mrf.mxu0
    %v438 = vadd.f32 0.0, %v437
    %v439 = vpop.f32.mrf.mxu0
    %440 = vdwg.mxu0
    %v441 = vadd.f32 %v51, %v283
    %v442 = vadd.f32 %v52, %v288
    %v443 = vadd.f32 %v53, %v293
    %v444 = vadd.f32 %v54, %v298
    %v445 = vadd.f32 %v55, %v303
    %v446 = vadd.f32 %v56, %v308
    %v447 = vadd.f32 %v57, %v313
    %v448 = vadd.f32 %v58, %v318
    %v449 = vadd.f32 %v59, %v323
    %v450 = vadd.f32 %v60, %v328
    %v451 = vadd.f32 %v61, %v333
    %v452 = vadd.f32 %v62, %v338
    %v453 = vadd.f32 %v63, %v343
    %v454 = vadd.f32 %v64, %v348
    %v455 = vadd.f32 %v65, %v353
    %v456 = vadd.f32 %v66, %v358
    %v457 = vadd.f32 %v67, %v363
    %v458 = vadd.f32 %v68, %v368
    %v459 = vadd.f32 %v69, %v373
    %v460 = vadd.f32 %v70, %v378
    %v461 = vadd.f32 %v71, %v383
    %v462 = vadd.f32 %v72, %v388
    %v463 = vadd.f32 %v73, %v393
    %v464 = vadd.f32 %v74, %v398
    %v465 = vadd.f32 %v75, %v403
    %v466 = vadd.f32 %v76, %v408
    %v467 = vadd.f32 %v77, %v413
    %v468 = vadd.f32 %v78, %v418
    %v469 = vadd.f32 %v79, %v423
    %v470 = vadd.f32 %v80, %v428
    %v471 = vadd.f32 %v81, %v433
    %v472 = vadd.f32 %v82, %v438
    %473 = vst [vmem:[#allocation2] sm:$0xff] %v441
    %474 = vst [vmem:[#allocation2 + $0x8] sm:$0xff] %v442
    %475 = vst [vmem:[#allocation2 + $0x10] sm:$0xff] %v443
    %476 = vst [vmem:[#allocation2 + $0x18] sm:$0xff] %v444
    %477 = vst [vmem:[#allocation2 + $0x20] sm:$0xff] %v445
    %478 = vst [vmem:[#allocation2 + $0x28] sm:$0xff] %v446
    %479 = vst [vmem:[#allocation2 + $0x30] sm:$0xff] %v447
    %480 = vst [vmem:[#allocation2 + $0x38] sm:$0xff] %v448
    %481 = vst [vmem:[#allocation2 + $0x40] sm:$0xff] %v449
    %482 = vst [vmem:[#allocation2 + $0x48] sm:$0xff] %v450
    %483 = vst [vmem:[#allocation2 + $0x50] sm:$0xff] %v451
    %484 = vst [vmem:[#allocation2 + $0x58] sm:$0xff] %v452
    %485 = vst [vmem:[#allocation2 + $0x60] sm:$0xff] %v453
    %486 = vst [vmem:[#allocation2 + $0x68] sm:$0xff] %v454
    %487 = vst [vmem:[#allocation2 + $0x70] sm:$0xff] %v455
    %488 = vst [vmem:[#allocation2 + $0x78] sm:$0xff] %v456
    %489 = vst [vmem:[#allocation2 + $0x80] sm:$0xff] %v457
    %490 = vst [vmem:[#allocation2 + $0x88] sm:$0xff] %v458
    %491 = vst [vmem:[#allocation2 + $0x90] sm:$0xff] %v459
    %492 = vst [vmem:[#allocation2 + $0x98] sm:$0xff] %v460
    %493 = vst [vmem:[#allocation2 + $0xa0] sm:$0xff] %v461
    %494 = vst [vmem:[#allocation2 + $0xa8] sm:$0xff] %v462
    %495 = vst [vmem:[#allocation2 + $0xb0] sm:$0xff] %v463
    %496 = vst [vmem:[#allocation2 + $0xb8] sm:$0xff] %v464
    %497 = vst [vmem:[#allocation2 + $0xc0] sm:$0xff] %v465
    %498 = vst [vmem:[#allocation2 + $0xc8] sm:$0xff] %v466
    %499 = vst [vmem:[#allocation2 + $0xd0] sm:$0xff] %v467
    %500 = vst [vmem:[#allocation2 + $0xd8] sm:$0xff] %v468
    %501 = vst [vmem:[#allocation2 + $0xe0] sm:$0xff] %v469
    %502 = vst [vmem:[#allocation2 + $0xe8] sm:$0xff] %v470
    %503 = vst [vmem:[#allocation2 + $0xf0] sm:$0xff] %v471
    %504 = vst [vmem:[#allocation2 + $0xf8] sm:$0xff] %v472
    // Predicated region
    $region18: #{tpu_custom_call.1} parent=1 // pred_check
      %p505 = pneg %p15
    $region19: #{tpu_custom_call.1} parent=1 // pred_check_branch
      %507 = sbr.rel (%p505) target = $region21
    $region20: #{tpu_custom_call.1} parent=1 // pred_region
      %v508 = vld [vmem:[#allocation2] sm:$0xff]
      %v509 = vld [vmem:[#allocation2 + $0x8] sm:$0xff]
      %v510 = vld [vmem:[#allocation2 + $0x10] sm:$0xff]
      %v511 = vld [vmem:[#allocation2 + $0x18] sm:$0xff]
      %v512 = vld [vmem:[#allocation2 + $0x20] sm:$0xff]
      %v513 = vld [vmem:[#allocation2 + $0x28] sm:$0xff]
      %v514 = vld [vmem:[#allocation2 + $0x30] sm:$0xff]
      %v515 = vld [vmem:[#allocation2 + $0x38] sm:$0xff]
      %v516 = vld [vmem:[#allocation2 + $0x40] sm:$0xff]
      %v517 = vld [vmem:[#allocation2 + $0x48] sm:$0xff]
      %v518 = vld [vmem:[#allocation2 + $0x50] sm:$0xff]
      %v519 = vld [vmem:[#allocation2 + $0x58] sm:$0xff]
      %v520 = vld [vmem:[#allocation2 + $0x60] sm:$0xff]
      %v521 = vld [vmem:[#allocation2 + $0x68] sm:$0xff]
      %v522 = vld [vmem:[#allocation2 + $0x70] sm:$0xff]
      %v523 = vld [vmem:[#allocation2 + $0x78] sm:$0xff]
      %v524 = vld [vmem:[#allocation2 + $0x80] sm:$0xff]
      %v525 = vld [vmem:[#allocation2 + $0x88] sm:$0xff]
      %v526 = vld [vmem:[#allocation2 + $0x90] sm:$0xff]
      %v527 = vld [vmem:[#allocation2 + $0x98] sm:$0xff]
      %v528 = vld [vmem:[#allocation2 + $0xa0] sm:$0xff]
      %v529 = vld [vmem:[#allocation2 + $0xa8] sm:$0xff]
      %v530 = vld [vmem:[#allocation2 + $0xb0] sm:$0xff]
      %v531 = vld [vmem:[#allocation2 + $0xb8] sm:$0xff]
      %v532 = vld [vmem:[#allocation2 + $0xc0] sm:$0xff]
      %v533 = vld [vmem:[#allocation2 + $0xc8] sm:$0xff]
      %v534 = vld [vmem:[#allocation2 + $0xd0] sm:$0xff]
      %v535 = vld [vmem:[#allocation2 + $0xd8] sm:$0xff]
      %v536 = vld [vmem:[#allocation2 + $0xe0] sm:$0xff]
      %v537 = vld [vmem:[#allocation2 + $0xe8] sm:$0xff]
      %v538 = vld [vmem:[#allocation2 + $0xf0] sm:$0xff]
      %v539 = vld [vmem:[#allocation2 + $0xf8] sm:$0xff]
      %v540 = vld [vmem:[%s2] sm:$0x1]
      %v542 = vlaneseq
      %v543 = vshrl.u32 %v542, 7
      %v544 = vsub.s32 0, %v543
      %v545 = vrot.slane %v540, %v544
      %v547 = vadd.f32 %v508, %v545
      %v548 = vadd.f32 %v509, %v545
      %v549 = vadd.f32 %v510, %v545
      %v550 = vadd.f32 %v511, %v545
      %v551 = vadd.f32 %v512, %v545
      %v552 = vadd.f32 %v513, %v545
      %v553 = vadd.f32 %v514, %v545
      %v554 = vadd.f32 %v515, %v545
      %v555 = vadd.f32 %v516, %v545
      %v556 = vadd.f32 %v517, %v545
      %v557 = vadd.f32 %v518, %v545
      %v558 = vadd.f32 %v519, %v545
      %v559 = vadd.f32 %v520, %v545
      %v560 = vadd.f32 %v521, %v545
      %v561 = vadd.f32 %v522, %v545
      %v562 = vadd.f32 %v523, %v545
      %v563 = vadd.f32 %v524, %v545
      %v564 = vadd.f32 %v525, %v545
      %v565 = vadd.f32 %v526, %v545
      %v566 = vadd.f32 %v527, %v545
      %v567 = vadd.f32 %v528, %v545
      %v568 = vadd.f32 %v529, %v545
      %v569 = vadd.f32 %v530, %v545
      %v570 = vadd.f32 %v531, %v545
      %v571 = vadd.f32 %v532, %v545
      %v572 = vadd.f32 %v533, %v545
      %v573 = vadd.f32 %v534, %v545
      %v574 = vadd.f32 %v535, %v545
      %v575 = vadd.f32 %v536, %v545
      %v576 = vadd.f32 %v537, %v545
      %v577 = vadd.f32 %v538, %v545
      %v578 = vadd.f32 %v539, %v545
      %v579 = vmax.f32 %v547, 0.0
      %v580 = vmax.f32 %v548, 0.0
      %v581 = vmax.f32 %v549, 0.0
      %v582 = vmax.f32 %v550, 0.0
      %v583 = vmax.f32 %v551, 0.0
      %v584 = vmax.f32 %v552, 0.0
      %v585 = vmax.f32 %v553, 0.0
      %v586 = vmax.f32 %v554, 0.0
      %v587 = vmax.f32 %v555, 0.0
      %v588 = vmax.f32 %v556, 0.0
      %v589 = vmax.f32 %v557, 0.0
      %v590 = vmax.f32 %v558, 0.0
      %v591 = vmax.f32 %v559, 0.0
      %v592 = vmax.f32 %v560, 0.0
      %v593 = vmax.f32 %v561, 0.0
      %v594 = vmax.f32 %v562, 0.0
      %v595 = vmax.f32 %v563, 0.0
      %v596 = vmax.f32 %v564, 0.0
      %v597 = vmax.f32 %v565, 0.0
      %v598 = vmax.f32 %v566, 0.0
      %v599 = vmax.f32 %v567, 0.0
      %v600 = vmax.f32 %v568, 0.0
      %v601 = vmax.f32 %v569, 0.0
      %v602 = vmax.f32 %v570, 0.0
      %v603 = vmax.f32 %v571, 0.0
      %v604 = vmax.f32 %v572, 0.0
      %v605 = vmax.f32 %v573, 0.0
      %v606 = vmax.f32 %v574, 0.0
      %v607 = vmax.f32 %v575, 0.0
      %v608 = vmax.f32 %v576, 0.0
      %v609 = vmax.f32 %v577, 0.0
      %v610 = vmax.f32 %v578, 0.0
      %611 = vst [vmem:[#allocation3] sm:$0xff] %v579
      %612 = vst [vmem:[#allocation3 + $0x8] sm:$0xff] %v580
      %613 = vst [vmem:[#allocation3 + $0x10] sm:$0xff] %v581
      %614 = vst [vmem:[#allocation3 + $0x18] sm:$0xff] %v582
      %615 = vst [vmem:[#allocation3 + $0x20] sm:$0xff] %v583
      %616 = vst [vmem:[#allocation3 + $0x28] sm:$0xff] %v584
      %617 = vst [vmem:[#allocation3 + $0x30] sm:$0xff] %v585
      %618 = vst [vmem:[#allocation3 + $0x38] sm:$0xff] %v586
      %619 = vst [vmem:[#allocation3 + $0x40] sm:$0xff] %v587
      %620 = vst [vmem:[#allocation3 + $0x48] sm:$0xff] %v588
      %621 = vst [vmem:[#allocation3 + $0x50] sm:$0xff] %v589
      %622 = vst [vmem:[#allocation3 + $0x58] sm:$0xff] %v590
      %623 = vst [vmem:[#allocation3 + $0x60] sm:$0xff] %v591
      %624 = vst [vmem:[#allocation3 + $0x68] sm:$0xff] %v592
      %625 = vst [vmem:[#allocation3 + $0x70] sm:$0xff] %v593
      %626 = vst [vmem:[#allocation3 + $0x78] sm:$0xff] %v594
      %627 = vst [vmem:[#allocation3 + $0x80] sm:$0xff] %v595
      %628 = vst [vmem:[#allocation3 + $0x88] sm:$0xff] %v596
      %629 = vst [vmem:[#allocation3 + $0x90] sm:$0xff] %v597
      %630 = vst [vmem:[#allocation3 + $0x98] sm:$0xff] %v598
      %631 = vst [vmem:[#allocation3 + $0xa0] sm:$0xff] %v599
      %632 = vst [vmem:[#allocation3 + $0xa8] sm:$0xff] %v600
      %633 = vst [vmem:[#allocation3 + $0xb0] sm:$0xff] %v601
      %634 = vst [vmem:[#allocation3 + $0xb8] sm:$0xff] %v602
      %635 = vst [vmem:[#allocation3 + $0xc0] sm:$0xff] %v603
      %636 = vst [vmem:[#allocation3 + $0xc8] sm:$0xff] %v604
      %637 = vst [vmem:[#allocation3 + $0xd0] sm:$0xff] %v605
      %638 = vst [vmem:[#allocation3 + $0xd8] sm:$0xff] %v606
      %639 = vst [vmem:[#allocation3 + $0xe0] sm:$0xff] %v607
      %640 = vst [vmem:[#allocation3 + $0xe8] sm:$0xff] %v608
      %641 = vst [vmem:[#allocation3 + $0xf0] sm:$0xff] %v609
      %642 = vst [vmem:[#allocation3 + $0xf8] sm:$0xff] %v610
    $region21: #{tpu_custom_call.1} parent=1 // pred_fallthru
      _
    // Predicated region
    $region22: #{tpu_custom_call.1} parent=1 // pred_check
      _
    $region23: #{tpu_custom_call.1} parent=1 // pred_check_branch
      %644 = sbr.rel (0) target = $region25
    $region24: #{tpu_custom_call.1} parent=1 // pred_region
      %s646 = ssub.s32 4096, 4096
      %647 = vsyncadd [#allocation4], %s646
      %s648 = sshll.u32 [#allocation3], 4
      %s649 = int_to_ptr.vmem [resolvable:$true] %s648
      %654 = dma.vmem_to_hbm [thread:$0]  %s649, 4096, %s3, [#allocation4], 128, 128, 8
    $region25: #{tpu_custom_call.1} parent=1 // pred_fallthru
      _
    // Predicated region
    $region26: #{tpu_custom_call.1} parent=1 // pred_check
      _
    $region27: #{tpu_custom_call.1} parent=1 // pred_check_branch
      %656 = sbr.rel (0) target = $region29
    $region28: #{tpu_custom_call.1} parent=1 // pred_region
      %657 = dma.done [#allocation4], 4096
    $region29: #{tpu_custom_call.1} parent=1 // pred_fallthru
      _
    %658 = vsyncpa [#allocation4], 1

</llo_original>
